<compile_context>
chip_gen: v7x
topology: tpu7x:2x2x1
jax: 0.10.0
libtpu: 0.0.40
codegen_flags: <defaults>
</compile_context>

<pallas_src>
import functools

import jax
import jax.numpy as jnp
from jax.experimental import pallas as pl
from jax.experimental.pallas import tpu as pltpu

LANE = 128  # vreg lane width; pad feature dims to multiples of this.


def _round_up(n, m):
    return ((n + m - 1) // m) * m


def _pad2d(a, rows, cols):
    return jnp.pad(a, ((0, rows - a.shape[0]), (0, cols - a.shape[1])))


def mlp_kernel(x_ref, w1_ref, b1_ref, w2_ref, b2_ref, w3_ref, b3_ref, o_ref, h_ref):
    """One batch tile of the MLP: 3 MXU matmuls (f32 accumulation) + 2 f32 tanh (EUP).

    Hidden activations are staged through the VMEM scratch `h_ref` in the compute
    dtype (bf16 by default) so large batch tiles keep vreg pressure bounded.
    """
    a1 = jnp.dot(x_ref[...], w1_ref[...], preferred_element_type=jnp.float32)
    h_ref[...] = jnp.tanh(a1 + b1_ref[...]).astype(h_ref.dtype)

    a2 = jnp.dot(h_ref[...], w2_ref[...], preferred_element_type=jnp.float32)
    h_ref[...] = jnp.tanh(a2 + b2_ref[...]).astype(h_ref.dtype)

    a3 = jnp.dot(h_ref[...], w3_ref[...], preferred_element_type=jnp.float32)
    o_ref[...] = (a3 + b3_ref[...]).astype(o_ref.dtype)


def mlp_forward(x, params, *, batch_tile=256, compute_dtype=jnp.bfloat16):
    """Run the Pallas MLP kernel, tiling over the batch dimension.

    Pads batch to a multiple of the batch tile and feature dims to multiples of 128
    (lane-dense), runs the kernel, then slices back to the logical output shape.
    """
    (w1, b1), (w2, b2), (w3, b3) = params
    B, din = x.shape
    hid = w1.shape[1]
    dout = w3.shape[1]
    assert w2.shape == (hid, hid) and w3.shape[0] == hid

    din_p = _round_up(din, LANE)
    hid_p = _round_up(hid, LANE)
    dout_p = _round_up(dout, LANE)

    assert batch_tile % 8 == 0, "batch tile must be a multiple of the 8-row sublane"
    bt = min(batch_tile, _round_up(B, 8))
    B_p = _round_up(B, bt)
    grid = (B_p // bt,)

    # Zero-padding is exact: padded x cols / W rows are zero, padded hidden lanes are
    # tanh(0) = 0, padded output cols are zero and get sliced off below.
    x_p = _pad2d(x, B_p, din_p).astype(compute_dtype)
    w1_p = _pad2d(w1, din_p, hid_p).astype(compute_dtype)
    w2_p = _pad2d(w2, hid_p, hid_p).astype(compute_dtype)
    w3_p = _pad2d(w3, hid_p, dout_p).astype(compute_dtype)
    b1_p = _pad2d(b1, 1, hid_p).astype(jnp.float32)
    b2_p = _pad2d(b2, 1, hid_p).astype(jnp.float32)
    b3_p = _pad2d(b3, 1, dout_p).astype(jnp.float32)

    cbytes = jnp.dtype(compute_dtype).itemsize
    cost = pl.CostEstimate(
        flops=2 * B_p * (din_p * hid_p + hid_p * hid_p + hid_p * dout_p),
        transcendentals=2 * B_p * hid_p,
        bytes_accessed=(x_p.size + w1_p.size + w2_p.size + w3_p.size) * cbytes
        + (b1_p.size + b2_p.size + b3_p.size) * 4
        + B_p * dout_p * 4,
    )

    # Constant-index blocks: weights/biases stay VMEM-resident across all grid steps.
    full = lambda shape: pl.BlockSpec(shape, lambda i: (0, 0))

    out_p = pl.pallas_call(
        mlp_kernel,
        out_shape=jax.ShapeDtypeStruct((B_p, dout_p), jnp.float32),
        grid_spec=pltpu.PrefetchScalarGridSpec(
            num_scalar_prefetch=0,
            grid=grid,
            in_specs=[
                pl.BlockSpec((bt, din_p), lambda i: (i, 0)),
                full((din_p, hid_p)),
                full((1, hid_p)),
                full((hid_p, hid_p)),
                full((1, hid_p)),
                full((hid_p, dout_p)),
                full((1, dout_p)),
            ],
            out_specs=pl.BlockSpec((bt, dout_p), lambda i: (i, 0)),
            scratch_shapes=[pltpu.VMEM((bt, hid_p), compute_dtype)],
        ),
        compiler_params=pltpu.CompilerParams(
            dimension_semantics=("parallel",),  # shards batch tiles across TCs (v7x)
            vmem_limit_bytes=32 * 1024 * 1024,  # safe on v5e/v6e/v7x; usage here ~1 MiB
        ),
        cost_estimate=cost,
    )(x_p, w1_p, b1_p, w2_p, b2_p, w3_p, b3_p)

    return out_p[:B, :dout]


def init_mlp_params(key, input_dim, output_dim, hidden_size=64, hidden_depth=2,
                    dtype=jnp.float32):
    """Deterministic parameter init mirroring MLP.__init__ shapes.

    PyTorch init_func applies orthogonal_ to weights and constant_(0) to biases; we
    use a deterministic orthogonal-ish init via QR on Gaussian draws, zero biases.
    Weights are returned as (in_features, out_features).
    """
    assert hidden_depth == 2, "this script mirrors the default hidden_depth=2 config"
    dims = [input_dim, hidden_size, hidden_size, output_dim]
    params = []
    for din, dout in zip(dims[:-1], dims[1:]):
        key, sub = jax.random.split(key)
        a = jax.random.normal(sub, (max(din, dout), min(din, dout)), dtype=jnp.float32)
        q, _ = jnp.linalg.qr(a)  # orthonormal columns
        w = q[:din, :dout] if din >= dout else q[:dout, :din].T
        b = jnp.zeros((1, dout), dtype=dtype)
        params.append((w.astype(dtype), b))
    return params


def mlp_reference(x, params, compute_dtype=jnp.float32):
    """Plain-JAX reference (nn.Sequential(Linear, Tanh, Linear, Tanh, Linear)).

    With compute_dtype=bfloat16 it mirrors the kernel's quantization points
    (bf16 matmul operands, f32 accumulation, f32 tanh) for a tight comparison.
    """
    (w1, b1), (w2, b2), (w3, b3) = params
    c = lambda a: a.astype(compute_dtype).astype(jnp.float32)
    dot = functools.partial(jnp.dot, precision=jax.lax.Precision.HIGHEST)
    h = jnp.tanh(dot(c(x), c(w1)) + b1)
    h = jnp.tanh(dot(c(h), c(w2)) + b2)
    return dot(c(h), c(w3)) + b3


if __name__ == "__main__":
    key = jax.random.PRNGKey(0)

    batch = 256        # small demo size; batch_tile=128 gives a 2-step grid so both
    input_dim = 32     # v7x TensorCores get work.  Real workloads: sweep 256-1024.
    output_dim = 16
    hidden_size = 64

    kx, kp = jax.random.split(key)
    x = jax.random.normal(kx, (batch, input_dim), dtype=jnp.float32)
    params = init_mlp_params(kp, input_dim, output_dim, hidden_size=hidden_size,
                             hidden_depth=2)

    out = mlp_forward(x, params, batch_tile=128, compute_dtype=jnp.bfloat16)
    out = jax.block_until_ready(out)

    assert out.shape == (batch, output_dim)

    # Tight check against a reference that mirrors the kernel's bf16/f32 numerics.
    ref_mirrored = mlp_reference(x, params, compute_dtype=jnp.bfloat16)
    assert jnp.allclose(out, ref_mirrored, atol=2e-3, rtol=2e-3), \
        "Pallas output mismatch vs mirrored-precision reference"

    # Looser semantic check against the pure-f32 PyTorch-equivalent forward pass.
    ref_f32 = mlp_reference(x, params, compute_dtype=jnp.float32)
    assert jnp.allclose(out, ref_f32, atol=5e-2, rtol=5e-2), \
        "Pallas output mismatch vs f32 reference"

    # Note: `detach=True` in MLP.forward() is a no-op for inference semantics here.
    print("KERNEL_OK")
</pallas_src>

<mosaic_0001>
module attributes {stable_mosaic.version = 11 : i64} {
  func.func @mlp_kernel(%arg0: i32, %arg1: memref<128x128xbf16, #tpu.memory_space<vmem>>, %arg2: memref<128x128xbf16, #tpu.memory_space<vmem>>, %arg3: memref<1x128xf32, #tpu.memory_space<vmem>>, %arg4: memref<128x128xbf16, #tpu.memory_space<vmem>>, %arg5: memref<1x128xf32, #tpu.memory_space<vmem>>, %arg6: memref<128x128xbf16, #tpu.memory_space<vmem>>, %arg7: memref<1x128xf32, #tpu.memory_space<vmem>>, %arg8: memref<128x128xf32, #tpu.memory_space<vmem>>, %arg9: memref<128x128xbf16, #tpu.memory_space<vmem>>) attributes {dimension_semantics = [#tpu.dimension_semantics<parallel>], iteration_bounds = array<i64: 2>, scalar_prefetch = 0 : i64, scratch_operands = 1 : i64, tpu.core_type = #tpu.core_type<tc>, window_params = [{transform_indices = @transform_0, window_bounds = array<i64: 128, 128>}, {pipeline_mode = #tpu.pipeline_mode<synchronous>, transform_indices = @transform_1, window_bounds = array<i64: 128, 128>}, {pipeline_mode = #tpu.pipeline_mode<synchronous>, transform_indices = @transform_2, window_bounds = array<i64: 1, 128>}, {pipeline_mode = #tpu.pipeline_mode<synchronous>, transform_indices = @transform_3, window_bounds = array<i64: 128, 128>}, {pipeline_mode = #tpu.pipeline_mode<synchronous>, transform_indices = @transform_4, window_bounds = array<i64: 1, 128>}, {pipeline_mode = #tpu.pipeline_mode<synchronous>, transform_indices = @transform_5, window_bounds = array<i64: 128, 128>}, {pipeline_mode = #tpu.pipeline_mode<synchronous>, transform_indices = @transform_6, window_bounds = array<i64: 1, 128>}, {transform_indices = @transform_7, window_bounds = array<i64: 128, 128>}]} {
    %c0 = arith.constant 0 : index
    %c0_0 = arith.constant 0 : index
    %0 = vector.load %arg1[%c0, %c0_0] : memref<128x128xbf16, #tpu.memory_space<vmem>>, vector<128x128xbf16>
    %c0_1 = arith.constant 0 : index
    %c0_2 = arith.constant 0 : index
    %1 = vector.load %arg2[%c0_1, %c0_2] : memref<128x128xbf16, #tpu.memory_space<vmem>>, vector<128x128xbf16>
    %cst = arith.constant dense<0.000000e+00> : vector<128x128xf32>
    %2 = tpu.matmul %0, %1, %cst {dimension_numbers = #tpu.dot_dimension_numbers<[1], [0], [0], [1], [0, 0, 1, 1], [], []>} : vector<128x128xbf16>, vector<128x128xbf16>, vector<128x128xf32> -> vector<128x128xf32>
    %c0_3 = arith.constant 0 : index
    %c0_4 = arith.constant 0 : index
    %3 = vector.load %arg3[%c0_3, %c0_4] : memref<1x128xf32, #tpu.memory_space<vmem>>, vector<1x128xf32>
    %4 = vector.broadcast %3 : vector<1x128xf32> to vector<128x128xf32>
    %5 = arith.addf %2, %4 : vector<128x128xf32>
    %6 = math.tanh %5 : vector<128x128xf32>
    %7 = arith.truncf %6 : vector<128x128xf32> to vector<128x128xbf16>
    %c0_5 = arith.constant 0 : index
    %c0_6 = arith.constant 0 : index
    %8 = vector.load %arg9[%c0_5, %c0_6] : memref<128x128xbf16, #tpu.memory_space<vmem>>, vector<128x128xbf16>
    tpu.vector_store %arg9[%c0_5, %c0_6], %7 {strides = array<i32>} : memref<128x128xbf16, #tpu.memory_space<vmem>>, vector<128x128xbf16>,
    %c0_7 = arith.constant 0 : index
    %c0_8 = arith.constant 0 : index
    %9 = vector.load %arg9[%c0_7, %c0_8] : memref<128x128xbf16, #tpu.memory_space<vmem>>, vector<128x128xbf16>
    %c0_9 = arith.constant 0 : index
    %c0_10 = arith.constant 0 : index
    %10 = vector.load %arg4[%c0_9, %c0_10] : memref<128x128xbf16, #tpu.memory_space<vmem>>, vector<128x128xbf16>
    %cst_11 = arith.constant dense<0.000000e+00> : vector<128x128xf32>
    %11 = tpu.matmul %9, %10, %cst_11 {dimension_numbers = #tpu.dot_dimension_numbers<[1], [0], [0], [1], [0, 0, 1, 1], [], []>} : vector<128x128xbf16>, vector<128x128xbf16>, vector<128x128xf32> -> vector<128x128xf32>
    %c0_12 = arith.constant 0 : index
    %c0_13 = arith.constant 0 : index
    %12 = vector.load %arg5[%c0_12, %c0_13] : memref<1x128xf32, #tpu.memory_space<vmem>>, vector<1x128xf32>
    %13 = vector.broadcast %12 : vector<1x128xf32> to vector<128x128xf32>
    %14 = arith.addf %11, %13 : vector<128x128xf32>
    %15 = math.tanh %14 : vector<128x128xf32>
    %16 = arith.truncf %15 : vector<128x128xf32> to vector<128x128xbf16>
    %c0_14 = arith.constant 0 : index
    %c0_15 = arith.constant 0 : index
    %17 = vector.load %arg9[%c0_14, %c0_15] : memref<128x128xbf16, #tpu.memory_space<vmem>>, vector<128x128xbf16>
    tpu.vector_store %arg9[%c0_14, %c0_15], %16 {strides = array<i32>} : memref<128x128xbf16, #tpu.memory_space<vmem>>, vector<128x128xbf16>,
    %c0_16 = arith.constant 0 : index
    %c0_17 = arith.constant 0 : index
    %18 = vector.load %arg9[%c0_16, %c0_17] : memref<128x128xbf16, #tpu.memory_space<vmem>>, vector<128x128xbf16>
    %c0_18 = arith.constant 0 : index
    %c0_19 = arith.constant 0 : index
    %19 = vector.load %arg6[%c0_18, %c0_19] : memref<128x128xbf16, #tpu.memory_space<vmem>>, vector<128x128xbf16>
    %cst_20 = arith.constant dense<0.000000e+00> : vector<128x128xf32>
    %20 = tpu.matmul %18, %19, %cst_20 {dimension_numbers = #tpu.dot_dimension_numbers<[1], [0], [0], [1], [0, 0, 1, 1], [], []>} : vector<128x128xbf16>, vector<128x128xbf16>, vector<128x128xf32> -> vector<128x128xf32>
    %c0_21 = arith.constant 0 : index
    %c0_22 = arith.constant 0 : index
    %21 = vector.load %arg7[%c0_21, %c0_22] : memref<1x128xf32, #tpu.memory_space<vmem>>, vector<1x128xf32>
    %22 = vector.broadcast %21 : vector<1x128xf32> to vector<128x128xf32>
    %23 = arith.addf %20, %22 : vector<128x128xf32>
    %c0_23 = arith.constant 0 : index
    %c0_24 = arith.constant 0 : index
    %24 = vector.load %arg8[%c0_23, %c0_24] : memref<128x128xf32, #tpu.memory_space<vmem>>, vector<128x128xf32>
    tpu.vector_store %arg8[%c0_23, %c0_24], %23 {strides = array<i32>} : memref<128x128xf32, #tpu.memory_space<vmem>>, vector<128x128xf32>,
    return
  }
  func.func @transform_0(%arg0: i32) -> (i32, i32) {
    %c0_i32 = arith.constant 0 : i32
    %c0_i32_0 = arith.constant 0 : i32
    return %arg0, %c0_i32 : i32, i32
  }
  func.func @transform_1(%arg0: i32) -> (i32, i32) {
    %c0_i32 = arith.constant 0 : i32
    %c0_i32_0 = arith.constant 0 : i32
    %c0_i32_1 = arith.constant 0 : i32
    return %c0_i32, %c0_i32_0 : i32, i32
  }
  func.func @transform_2(%arg0: i32) -> (i32, i32) {
    %c0_i32 = arith.constant 0 : i32
    %c0_i32_0 = arith.constant 0 : i32
    %c0_i32_1 = arith.constant 0 : i32
    return %c0_i32, %c0_i32_0 : i32, i32
  }
  func.func @transform_3(%arg0: i32) -> (i32, i32) {
    %c0_i32 = arith.constant 0 : i32
    %c0_i32_0 = arith.constant 0 : i32
    %c0_i32_1 = arith.constant 0 : i32
    return %c0_i32, %c0_i32_0 : i32, i32
  }
  func.func @transform_4(%arg0: i32) -> (i32, i32) {
    %c0_i32 = arith.constant 0 : i32
    %c0_i32_0 = arith.constant 0 : i32
    %c0_i32_1 = arith.constant 0 : i32
    return %c0_i32, %c0_i32_0 : i32, i32
  }
  func.func @transform_5(%arg0: i32) -> (i32, i32) {
    %c0_i32 = arith.constant 0 : i32
    %c0_i32_0 = arith.constant 0 : i32
    %c0_i32_1 = arith.constant 0 : i32
    return %c0_i32, %c0_i32_0 : i32, i32
  }
  func.func @transform_6(%arg0: i32) -> (i32, i32) {
    %c0_i32 = arith.constant 0 : i32
    %c0_i32_0 = arith.constant 0 : i32
    %c0_i32_1 = arith.constant 0 : i32
    return %c0_i32, %c0_i32_0 : i32, i32
  }
  func.func @transform_7(%arg0: i32) -> (i32, i32) {
    %c0_i32 = arith.constant 0 : i32
    %c0_i32_0 = arith.constant 0 : i32
    return %arg0, %c0_i32 : i32, i32
  }
}

</mosaic_0001>

<llo_original>
// kernel: tpu_custom_call.1
$region0: #{tpu_custom_call.1}
  #allocation0 [shape = 'u32[]', space=smem, size = 0x4, offset = 0x4, fixed_abs, tag = 'smem constant byte address 0x4 - core index']
  #allocation1 [shape = 'u32[144,128]{1,0:T(1,128)}', space=vmem, size = 0x12000, scoped, tag = 'internal scratch']
  #allocation2 [shape = 'bf16[128,128]{1,0:T(16,128)(2,1)}', space=vmem, size = 0x8000, scoped, tag = 'scratch operand']
  %s0 = inlined_call_operand.hbm [shape: bf16[256,128], index: 0, kind: input, shape index: {}]
  %s1 = inlined_call_operand.hbm [shape: bf16[128,128], index: 1, kind: input, shape index: {}]
  %s2 = inlined_call_operand.vmem [shape: f32[1,128], index: 2, kind: input, shape index: {}]
  %s3 = inlined_call_operand.hbm [shape: bf16[128,128], index: 3, kind: input, shape index: {}]
  %s4 = inlined_call_operand.vmem [shape: f32[1,128], index: 4, kind: input, shape index: {}]
  %s5 = inlined_call_operand.hbm [shape: bf16[128,128], index: 5, kind: input, shape index: {}]
  %s6 = inlined_call_operand.vmem [shape: f32[1,128], index: 6, kind: input, shape index: {}]
  %s7 = inlined_call_operand.hbm [shape: f32[256,128], index: 7, kind: output, shape index: {}]
  %s8 = sld [smem:[#allocation0]]
  $region77: #{tpu_custom_call.1} parent=0
    _
  %s10 = ssub.s32 1, %s8
  %s11 = scalar_select 0, %s10, %s8
  $region1: #{tpu_custom_call.1} parent=0
    #allocation3 [shape = 'u8[65536]{0}', space=vmem, size = 0x10000, scoped, tag = 'input window, operand 0']
    #allocation4 [shape = 's32[2]{0}', space=sflag, size = 0x8, scoped, tag = 'scoped memory for tpu_custom_call.1']
    #allocation5 [shape = 's32[2]{0}', space=sflag, size = 0x8, scoped, tag = 'scoped memory for tpu_custom_call.1']
    #allocation6 [shape = 'u8[32768]{0}', space=vmem, size = 0x8000, scoped, tag = 'input window, operand 1, single buffered']
    #allocation7 [shape = 's32[1]{0}', space=sflag, size = 0x4, scoped, tag = 'scoped memory for tpu_custom_call.1']
    #allocation8 [shape = 'u8[32768]{0}', space=vmem, size = 0x8000, scoped, tag = 'input window, operand 3, single buffered']
    #allocation9 [shape = 'u8[32768]{0}', space=vmem, size = 0x8000, scoped, tag = 'input window, operand 5, single buffered']
    #allocation10 [shape = 's32[1]{0}', space=sflag, size = 0x4, scoped, tag = 'scoped memory for tpu_custom_call.1']
    #allocation11 [shape = 'u8[131072]{0}', space=vmem, size = 0x20000, scoped, tag = 'output window, operand 0']
    %12 = vsyncpa [#allocation4], 0
    %s13 = scalar_lea.sflag [#allocation4], 1
    %14 = vsyncpa %s13, 0
    %15 = vsyncpa [#allocation7], 0
    %16 = vsyncpa [#allocation10], 0
    %17 = vsyncpa [#allocation5], 0
    %s18 = scalar_lea.sflag [#allocation5], 1
    %19 = vsyncpa %s18, 0
    loop: start=0, step=1, limit=4
    $region2: #{tpu_custom_call.1} parent=1 // loop_pre_header
      _
    $region3: #{tpu_custom_call.1} parent=1 // loop_header
      %s21 = sphi 0, %s25
      %p22 = scmp.ge.s32.totalorder %s21, 4
      %s31 = sphi 0, %s33
      %s34 = sphi 0, %s31
      %s35 = sphi 0, %s34
      %s51 = sphi 0, %s35
      %s55 = sphi 0, %s55
      %s57 = sphi 0, %s55
      %s58 = sphi 0, %s57
      %s72 = sphi 0, %s58
      %s76 = sphi 0, %s76
      %s78 = sphi 0, %s76
      %s79 = sphi 0, %s78
      %s93 = sphi 0, %s79
      %s97 = sphi 0, %s97
      %s99 = sphi 0, %s97
      %s100 = sphi 0, %s99
      %s114 = sphi 0, %s100
      %s118 = sphi 0, %s118
      %s120 = sphi 0, %s118
      %s121 = sphi 0, %s120
      %s135 = sphi 0, %s121
      %s139 = sphi 0, %s139
      %s141 = sphi 0, %s139
      %s142 = sphi 0, %s141
      %s156 = sphi 0, %s142
      %s160 = sphi 0, %s160
      %s162 = sphi 0, %s160
      %s163 = sphi 0, %s162
      %s177 = sphi 0, %s163
      %s183 = sphi 0, %s185
      %s186 = sphi 0, %s183
      %s187 = sphi 0, %s186
      %s203 = sphi 0, %s187
    $region4: #{tpu_custom_call.1} parent=1 // loop_header_branch
      %24 = sbr.rel (%p22) target = $region8
    $region5: #{tpu_custom_call.1} parent=1 // loop_body
      %s26 = ssub.s32 %s21, 1
      %s27 = ssub.s32 %s21, 2
      %s28 = sadd.s32 %s21, 1
      %s29 = ssub.s32 %s21, %s28
      %p30 = scmp.eq.s32.totalorder %s29, 0
      %s32 = sadd.s32 %s31, 1
      %s33 = scalar_select %p30, %s31, %s32
      %p36 = pneg %p30
      %p37 = scmp.eq.s32.totalorder %s21, 1
      %p38 = por %p36, %p37
      %p39 = scmp.ne.s32.totalorder %s31, %s34
      %p40 = scmp.eq.s32.totalorder %s21, 0
      %p41 = por %p39, %p40
      %p42 = scmp.ne.s32.totalorder %s31, %s34
      %p43 = scmp.eq.s32.totalorder %s26, 1
      %p44 = por %p42, %p43
      %p45 = scmp.ne.s32.totalorder %s34, %s35
      %p46 = scmp.eq.s32.totalorder %s26, 0
      %p47 = por %p45, %p46
      %p48 = scmp.ne.s32.totalorder %s34, %s35
      %p49 = scmp.eq.s32.totalorder %s27, 1
      %p50 = por %p48, %p49
      %p52 = scmp.ne.s32.totalorder %s35, %s51
      %p53 = scmp.eq.s32.totalorder %s27, 0
      %p54 = por %p52, %p53
      %s56 = sadd.s32 %s55, 1
      %p59 = scmp.eq.s32.totalorder %s21, 1
      %p60 = scmp.ne.s32.totalorder %s55, %s57
      %p61 = scmp.eq.s32.totalorder %s21, 0
      %p62 = por %p60, %p61
      %p63 = scmp.ne.s32.totalorder %s55, %s57
      %p64 = scmp.eq.s32.totalorder %s26, 1
      %p65 = por %p63, %p64
      %p66 = scmp.ne.s32.totalorder %s57, %s58
      %p67 = scmp.eq.s32.totalorder %s26, 0
      %p68 = por %p66, %p67
      %p69 = scmp.ne.s32.totalorder %s57, %s58
      %p70 = scmp.eq.s32.totalorder %s27, 1
      %p71 = por %p69, %p70
      %p73 = scmp.ne.s32.totalorder %s58, %s72
      %p74 = scmp.eq.s32.totalorder %s27, 0
      %p75 = por %p73, %p74
      %s77 = sadd.s32 %s76, 1
      %p80 = scmp.eq.s32.totalorder %s21, 1
      %p81 = scmp.ne.s32.totalorder %s76, %s78
      %p82 = scmp.eq.s32.totalorder %s21, 0
      %p83 = por %p81, %p82
      %p84 = scmp.ne.s32.totalorder %s76, %s78
      %p85 = scmp.eq.s32.totalorder %s26, 1
      %p86 = por %p84, %p85
      %p87 = scmp.ne.s32.totalorder %s78, %s79
      %p88 = scmp.eq.s32.totalorder %s26, 0
      %p89 = por %p87, %p88
      %p90 = scmp.ne.s32.totalorder %s78, %s79
      %p91 = scmp.eq.s32.totalorder %s27, 1
      %p92 = por %p90, %p91
      %p94 = scmp.ne.s32.totalorder %s79, %s93
      %p95 = scmp.eq.s32.totalorder %s27, 0
      %p96 = por %p94, %p95
      %s98 = sadd.s32 %s97, 1
      %p101 = scmp.eq.s32.totalorder %s21, 1
      %p102 = scmp.ne.s32.totalorder %s97, %s99
      %p103 = scmp.eq.s32.totalorder %s21, 0
      %p104 = por %p102, %p103
      %p105 = scmp.ne.s32.totalorder %s97, %s99
      %p106 = scmp.eq.s32.totalorder %s26, 1
      %p107 = por %p105, %p106
      %p108 = scmp.ne.s32.totalorder %s99, %s100
      %p109 = scmp.eq.s32.totalorder %s26, 0
      %p110 = por %p108, %p109
      %p111 = scmp.ne.s32.totalorder %s99, %s100
      %p112 = scmp.eq.s32.totalorder %s27, 1
      %p113 = por %p111, %p112
      %p115 = scmp.ne.s32.totalorder %s100, %s114
      %p116 = scmp.eq.s32.totalorder %s27, 0
      %p117 = por %p115, %p116
      %s119 = sadd.s32 %s118, 1
      %p122 = scmp.eq.s32.totalorder %s21, 1
      %p123 = scmp.ne.s32.totalorder %s118, %s120
      %p124 = scmp.eq.s32.totalorder %s21, 0
      %p125 = por %p123, %p124
      %p126 = scmp.ne.s32.totalorder %s118, %s120
      %p127 = scmp.eq.s32.totalorder %s26, 1
      %p128 = por %p126, %p127
      %p129 = scmp.ne.s32.totalorder %s120, %s121
      %p130 = scmp.eq.s32.totalorder %s26, 0
      %p131 = por %p129, %p130
      %p132 = scmp.ne.s32.totalorder %s120, %s121
      %p133 = scmp.eq.s32.totalorder %s27, 1
      %p134 = por %p132, %p133
      %p136 = scmp.ne.s32.totalorder %s121, %s135
      %p137 = scmp.eq.s32.totalorder %s27, 0
      %p138 = por %p136, %p137
      %s140 = sadd.s32 %s139, 1
      %p143 = scmp.eq.s32.totalorder %s21, 1
      %p144 = scmp.ne.s32.totalorder %s139, %s141
      %p145 = scmp.eq.s32.totalorder %s21, 0
      %p146 = por %p144, %p145
      %p147 = scmp.ne.s32.totalorder %s139, %s141
      %p148 = scmp.eq.s32.totalorder %s26, 1
      %p149 = por %p147, %p148
      %p150 = scmp.ne.s32.totalorder %s141, %s142
      %p151 = scmp.eq.s32.totalorder %s26, 0
      %p152 = por %p150, %p151
      %p153 = scmp.ne.s32.totalorder %s141, %s142
      %p154 = scmp.eq.s32.totalorder %s27, 1
      %p155 = por %p153, %p154
      %p157 = scmp.ne.s32.totalorder %s142, %s156
      %p158 = scmp.eq.s32.totalorder %s27, 0
      %p159 = por %p157, %p158
      %s161 = sadd.s32 %s160, 1
      %p164 = scmp.eq.s32.totalorder %s21, 1
      %p165 = scmp.ne.s32.totalorder %s160, %s162
      %p166 = scmp.eq.s32.totalorder %s21, 0
      %p167 = por %p165, %p166
      %p168 = scmp.ne.s32.totalorder %s160, %s162
      %p169 = scmp.eq.s32.totalorder %s26, 1
      %p170 = por %p168, %p169
      %p171 = scmp.ne.s32.totalorder %s162, %s163
      %p172 = scmp.eq.s32.totalorder %s26, 0
      %p173 = por %p171, %p172
      %p174 = scmp.ne.s32.totalorder %s162, %s163
      %p175 = scmp.eq.s32.totalorder %s27, 1
      %p176 = por %p174, %p175
      %p178 = scmp.ne.s32.totalorder %s163, %s177
      %p179 = scmp.eq.s32.totalorder %s27, 0
      %p180 = por %p178, %p179
      %s181 = ssub.s32 %s21, %s28
      %p182 = scmp.eq.s32.totalorder %s181, 0
      %s184 = sadd.s32 %s183, 1
      %s185 = scalar_select %p182, %s183, %s184
      %p188 = pneg %p182
      %p189 = scmp.eq.s32.totalorder %s21, 1
      %p190 = por %p188, %p189
      %p191 = scmp.ne.s32.totalorder %s183, %s186
      %p192 = scmp.eq.s32.totalorder %s21, 0
      %p193 = por %p191, %p192
      %p194 = scmp.ne.s32.totalorder %s183, %s186
      %p195 = scmp.eq.s32.totalorder %s26, 1
      %p196 = por %p194, %p195
      %p197 = scmp.ne.s32.totalorder %s186, %s187
      %p198 = scmp.eq.s32.totalorder %s26, 0
      %p199 = por %p197, %p198
      %p200 = scmp.ne.s32.totalorder %s186, %s187
      %p201 = scmp.eq.s32.totalorder %s27, 1
      %p202 = por %p200, %p201
      %p204 = scmp.ne.s32.totalorder %s187, %s203
      %p205 = scmp.eq.s32.totalorder %s27, 0
      %p206 = por %p204, %p205
      %p207 = scmp.le.s32.totalorder 1, %s21
      %p208 = scmp.lt.s32.totalorder %s21, 3
      %p209 = pnand %p207, %p208
      %p210 = pneg %p209
      // Predicated region
      $region9: #{tpu_custom_call.1} parent=5 // pred_check
        _
      $region10: #{tpu_custom_call.1} parent=5 // pred_check_branch
        %212 = sbr.rel (%p209) target = $region12
      $region11: #{tpu_custom_call.1} parent=5 // pred_region
        %s213 = ssub.s32 %s21, 1
        // Predicated region
        $region13: #{tpu_custom_call.1} parent=11 // pred_check
          %p214 = pneg %p68
        $region14: #{tpu_custom_call.1} parent=11 // pred_check_branch
          %216 = sbr.rel (%p214) target = $region16
        $region15: #{tpu_custom_call.1} parent=11 // pred_region
          %s218 = ssub.s32 1024, 1024
          %219 = vsyncadd [#allocation7], %s218
          %s220 = sshll.u32 [#allocation6], 4
          %s221 = int_to_ptr.vmem [resolvable:$true] %s220
          %226 = dma.hbm_to_vmem [thread:$0]  %s1, 1024, %s221, [#allocation7], 64, 64, 4
        $region16: #{tpu_custom_call.1} parent=11 // pred_fallthru
          _
        // Predicated region
        $region17: #{tpu_custom_call.1} parent=11 // pred_check
          %p227 = pneg %p89
        $region18: #{tpu_custom_call.1} parent=11 // pred_check_branch
          %229 = sbr.rel (%p227) target = $region20
        $region19: #{tpu_custom_call.1} parent=11 // pred_region
          _
        $region20: #{tpu_custom_call.1} parent=11 // pred_fallthru
          _
        // Predicated region
        $region21: #{tpu_custom_call.1} parent=11 // pred_check
          %p230 = pneg %p110
        $region22: #{tpu_custom_call.1} parent=11 // pred_check_branch
          %232 = sbr.rel (%p230) target = $region24
        $region23: #{tpu_custom_call.1} parent=11 // pred_region
          %s234 = ssub.s32 1024, 1024
          %235 = vsyncadd [#allocation7], %s234
          %s236 = sshll.u32 [#allocation8], 4
          %s237 = int_to_ptr.vmem [resolvable:$true] %s236
          %242 = dma.hbm_to_vmem [thread:$0]  %s3, 1024, %s237, [#allocation7], 64, 64, 4
        $region24: #{tpu_custom_call.1} parent=11 // pred_fallthru
          _
        // Predicated region
        $region25: #{tpu_custom_call.1} parent=11 // pred_check
          %p243 = pneg %p131
        $region26: #{tpu_custom_call.1} parent=11 // pred_check_branch
          %245 = sbr.rel (%p243) target = $region28
        $region27: #{tpu_custom_call.1} parent=11 // pred_region
          _
        $region28: #{tpu_custom_call.1} parent=11 // pred_fallthru
          _
        // Predicated region
        $region29: #{tpu_custom_call.1} parent=11 // pred_check
          %p246 = pneg %p152
        $region30: #{tpu_custom_call.1} parent=11 // pred_check_branch
          %248 = sbr.rel (%p246) target = $region32
        $region31: #{tpu_custom_call.1} parent=11 // pred_region
          %s250 = ssub.s32 1024, 1024
          %251 = vsyncadd [#allocation10], %s250
          %s252 = sshll.u32 [#allocation9], 4
          %s253 = int_to_ptr.vmem [resolvable:$true] %s252
          %258 = dma.hbm_to_vmem [thread:$0]  %s5, 1024, %s253, [#allocation10], 64, 64, 4
        $region32: #{tpu_custom_call.1} parent=11 // pred_fallthru
          _
        // Predicated region
        $region33: #{tpu_custom_call.1} parent=11 // pred_check
          %p259 = pneg %p173
        $region34: #{tpu_custom_call.1} parent=11 // pred_check_branch
          %261 = sbr.rel (%p259) target = $region36
        $region35: #{tpu_custom_call.1} parent=11 // pred_region
          _
        $region36: #{tpu_custom_call.1} parent=11 // pred_fallthru
          _
      $region12: #{tpu_custom_call.1} parent=5 // pred_fallthru
        _
      %p262 = scmp.lt.s32.totalorder %s21, 2
      // Predicated region
      $region37: #{tpu_custom_call.1} parent=5 // pred_check
        %p263 = pneg %p262
      $region38: #{tpu_custom_call.1} parent=5 // pred_check_branch
        %265 = sbr.rel (%p263) target = $region40
      $region39: #{tpu_custom_call.1} parent=5 // pred_region
        // Predicated region
        $region41: #{tpu_custom_call.1} parent=39 // pred_check
          %p266 = pneg %p41
        $region42: #{tpu_custom_call.1} parent=39 // pred_check_branch
          %268 = sbr.rel (%p266) target = $region44
        $region43: #{tpu_custom_call.1} parent=39 // pred_region
          %s269 = sand.u32 %s31, 1
          %s270 = scalar_lea.sflag [#allocation4], %s269
          %s271 = sand.u32 %s31, 1
          %s272 = smul.addr %s271, 64
          %s273 = scalar_lea.vmem [#allocation3], %s272
          %s274 = smul.u32 16, %s21
          %s276 = ssub.s32 1024, 1024
          %277 = vsyncadd %s270, %s276
          %s278 = smul.addr %s274, 64
          %s279 = scalar_lea.hbm %s0, %s278
          %s280 = sshll.u32 %s273, 4
          %s281 = int_to_ptr.vmem [resolvable:$true] %s280
          %286 = dma.hbm_to_vmem [thread:$0]  %s279, 1024, %s281, %s270, 64, 64, 4
        $region44: #{tpu_custom_call.1} parent=39 // pred_fallthru
          _
      $region40: #{tpu_custom_call.1} parent=5 // pred_fallthru
        _
      %p287 = scmp.le.s32.totalorder 1, %s21
      %p288 = scmp.lt.s32.totalorder %s21, 3
      %p289 = pnand %p287, %p288
      %p290 = pneg %p289
      // Predicated region
      $region45: #{tpu_custom_call.1} parent=5 // pred_check
        _
      $region46: #{tpu_custom_call.1} parent=5 // pred_check_branch
        %292 = sbr.rel (%p289) target = $region48
      $region47: #{tpu_custom_call.1} parent=5 // pred_region
        %s293 = ssub.s32 %s21, 1
        %s294 = sand.u32 %s34, 1
        %s295 = scalar_lea.sflag [#allocation4], %s294
        %s296 = sand.u32 %s34, 1
        %s297 = smul.addr %s296, 64
        %s298 = scalar_lea.vmem [#allocation3], %s297
        // Predicated region
        $region49: #{tpu_custom_call.1} parent=47 // pred_check
          %p299 = pneg %p47
        $region50: #{tpu_custom_call.1} parent=47 // pred_check_branch
          %301 = sbr.rel (%p299) target = $region52
        $region51: #{tpu_custom_call.1} parent=47 // pred_region
          %302 = dma.done %s295, 1024
        $region52: #{tpu_custom_call.1} parent=47 // pred_fallthru
          _
        // Predicated region
        $region53: #{tpu_custom_call.1} parent=47 // pred_check
          %p303 = pneg %p68
        $region54: #{tpu_custom_call.1} parent=47 // pred_check_branch
          %305 = sbr.rel (%p303) target = $region56
        $region55: #{tpu_custom_call.1} parent=47 // pred_region
          %306 = dma.done [#allocation7], 1024
        $region56: #{tpu_custom_call.1} parent=47 // pred_fallthru
          _
        // Predicated region
        $region57: #{tpu_custom_call.1} parent=47 // pred_check
          %p307 = pneg %p110
        $region58: #{tpu_custom_call.1} parent=47 // pred_check_branch
          %309 = sbr.rel (%p307) target = $region60
        $region59: #{tpu_custom_call.1} parent=47 // pred_region
          %310 = dma.done [#allocation7], 1024
        $region60: #{tpu_custom_call.1} parent=47 // pred_fallthru
          _
        // Predicated region
        $region61: #{tpu_custom_call.1} parent=47 // pred_check
          %p311 = pneg %p152
        $region62: #{tpu_custom_call.1} parent=47 // pred_check_branch
          %313 = sbr.rel (%p311) target = $region64
        $region63: #{tpu_custom_call.1} parent=47 // pred_region
          %314 = dma.done [#allocation10], 1024
        $region64: #{tpu_custom_call.1} parent=47 // pred_fallthru
          _
        %s315 = sand.u32 %s34, 1
        %s316 = scalar_lea.sflag [#allocation4], %s315
        %s317 = sand.u32 %s34, 1
        %s318 = smul.addr %s317, 64
        %s319 = scalar_lea.vmem [#allocation3], %s318
        %p320 = pneg %p47
        %p321 = pneg %p44
        %p322 = pneg %p68
        %p323 = pneg %p65
        %p324 = pneg %p89
        %p325 = pneg %p86
        %p326 = pneg %p110
        %p327 = pneg %p107
        %p328 = pneg %p131
        %p329 = pneg %p128
        %p330 = pneg %p152
        %p331 = pneg %p149
        %p332 = pneg %p173
        %p333 = pneg %p170
        %p334 = pneg %p199
        %p335 = pneg %p196
        %s336 = sand.u32 %s186, 1
        %s337 = scalar_lea.sflag [#allocation5], %s336
        %s338 = sand.u32 %s186, 1
        %s339 = smul.addr %s338, 128
        %s340 = scalar_lea.vmem [#allocation11], %s339
        %s341 = smul.u32 16, %s26
        %s342 = smul.u32 16, %s26
        %v344 = vld [vmem:[%s298] sm:$0xf]
        %v345 = vld [vmem:[%s298 + $0x4] sm:$0xf]
        %v346 = vld [vmem:[%s298 + $0x8] sm:$0xf]
        %v347 = vld [vmem:[%s298 + $0xc] sm:$0xf]
        %v348 = vld [vmem:[%s298 + $0x10] sm:$0xf]
        %v349 = vld [vmem:[%s298 + $0x14] sm:$0xf]
        %v350 = vld [vmem:[%s298 + $0x18] sm:$0xf]
        %v351 = vld [vmem:[%s298 + $0x1c] sm:$0xf]
        %v352 = vld [vmem:[%s298 + $0x20] sm:$0xf]
        %v353 = vld [vmem:[%s298 + $0x24] sm:$0xf]
        %v354 = vld [vmem:[%s298 + $0x28] sm:$0xf]
        %v355 = vld [vmem:[%s298 + $0x2c] sm:$0xf]
        %v356 = vld [vmem:[%s298 + $0x30] sm:$0xf]
        %v357 = vld [vmem:[%s298 + $0x34] sm:$0xf]
        %v358 = vld [vmem:[%s298 + $0x38] sm:$0xf]
        %v359 = vld [vmem:[%s298 + $0x3c] sm:$0xf]
        %v360 = vld [vmem:[#allocation6] sm:$0xf]
        %v361 = vld [vmem:[#allocation6 + $0x4] sm:$0xf]
        %v362 = vld [vmem:[#allocation6 + $0x8] sm:$0xf]
        %v363 = vld [vmem:[#allocation6 + $0xc] sm:$0xf]
        %v364 = vld [vmem:[#allocation6 + $0x10] sm:$0xf]
        %v365 = vld [vmem:[#allocation6 + $0x14] sm:$0xf]
        %v366 = vld [vmem:[#allocation6 + $0x18] sm:$0xf]
        %v367 = vld [vmem:[#allocation6 + $0x1c] sm:$0xf]
        %v368 = vld [vmem:[#allocation6 + $0x20] sm:$0xf]
        %v369 = vld [vmem:[#allocation6 + $0x24] sm:$0xf]
        %v370 = vld [vmem:[#allocation6 + $0x28] sm:$0xf]
        %v371 = vld [vmem:[#allocation6 + $0x2c] sm:$0xf]
        %v372 = vld [vmem:[#allocation6 + $0x30] sm:$0xf]
        %v373 = vld [vmem:[#allocation6 + $0x34] sm:$0xf]
        %v374 = vld [vmem:[#allocation6 + $0x38] sm:$0xf]
        %v375 = vld [vmem:[#allocation6 + $0x3c] sm:$0xf]
        %v376 = vld [vmem:[%s2] sm:$0x1]
        %v378 = vlaneseq
        %v379 = vshrl.u32 %v378, 7
        %v380 = vsub.s32 0, %v379
        %v381 = vrot.slane %v376, %v380
        %v399 = vunpack.c.l.b16 %v344
        %v400 = vunpack.c.l.b16 %v345
        %v401 = vunpack.c.l.b16 %v346
        %v402 = vunpack.c.l.b16 %v347
        %v403 = vunpack.c.l.b16 %v348
        %v404 = vunpack.c.l.b16 %v349
        %v405 = vunpack.c.l.b16 %v350
        %v406 = vunpack.c.l.b16 %v351
        %v407 = vunpack.c.l.b16 %v352
        %v408 = vunpack.c.l.b16 %v353
        %v409 = vunpack.c.l.b16 %v354
        %v410 = vunpack.c.l.b16 %v355
        %v411 = vunpack.c.l.b16 %v356
        %v412 = vunpack.c.l.b16 %v357
        %v413 = vunpack.c.l.b16 %v358
        %v414 = vunpack.c.l.b16 %v359
        %v415 = vpack.c.b16 %v400, %v399
        %v416 = vpack.c.b16 %v402, %v401
        %v417 = vpack.c.b16 %v404, %v403
        %v418 = vpack.c.b16 %v406, %v405
        %v419 = vpack.c.b16 %v408, %v407
        %v420 = vpack.c.b16 %v410, %v409
        %v421 = vpack.c.b16 %v412, %v411
        %v422 = vpack.c.b16 %v414, %v413
        %v447 = vunpack.c.l.b16 %v360
        %v448 = vunpack.c.l.b16 %v361
        %v449 = vunpack.c.l.b16 %v362
        %v450 = vunpack.c.l.b16 %v363
        %v451 = vunpack.c.l.b16 %v364
        %v452 = vunpack.c.l.b16 %v365
        %v453 = vunpack.c.l.b16 %v366
        %v454 = vunpack.c.l.b16 %v367
        %v455 = vunpack.c.l.b16 %v368
        %v456 = vunpack.c.l.b16 %v369
        %v457 = vunpack.c.l.b16 %v370
        %v458 = vunpack.c.l.b16 %v371
        %v459 = vunpack.c.l.b16 %v372
        %v460 = vunpack.c.l.b16 %v373
        %v461 = vunpack.c.l.b16 %v374
        %v462 = vunpack.c.l.b16 %v375
        %v463 = vpack.c.b16 %v448, %v447
        %v464 = vpack.c.b16 %v450, %v449
        %v465 = vpack.c.b16 %v452, %v451
        %v466 = vpack.c.b16 %v454, %v453
        %v467 = vpack.c.b16 %v456, %v455
        %v468 = vpack.c.b16 %v458, %v457
        %v469 = vpack.c.b16 %v460, %v459
        %v470 = vpack.c.b16 %v462, %v461
        %479 = vmatprep.subr.bf16.mxu0 0
        %480 = vmatpush1.bf16.msra.mxu0 %v463
        %481 = vmatprep.subr.bf16.mxu0 0
        %482 = vmatpush1.bf16.msra.mxu0 %v464
        %483 = vmatprep.subr.bf16.mxu0 0
        %484 = vmatpush1.bf16.msra.mxu0 %v465
        %485 = vmatprep.subr.bf16.mxu0 0
        %486 = vmatpush1.bf16.msra.mxu0 %v466
        %487 = vmatprep.subr.bf16.mxu0 0
        %488 = vmatpush1.bf16.msra.mxu0 %v467
        %489 = vmatprep.subr.bf16.mxu0 0
        %490 = vmatpush1.bf16.msra.mxu0 %v468
        %491 = vmatprep.subr.bf16.mxu0 0
        %492 = vmatpush1.bf16.msra.mxu0 %v469
        %493 = vmatprep.subr.bf16.mxu0 0
        %494 = vmatpush1.bf16.msra.mxu0 %v470
        %495 = vmatprep.subr.bf16.mxu0 0
        %496 = vmatpush1.bf16.msra.mxu0 0
        %497 = vmatprep.subr.bf16.mxu0 0
        %498 = vmatpush1.bf16.msra.mxu0 0
        %499 = vmatprep.subr.bf16.mxu0 0
        %500 = vmatpush1.bf16.msra.mxu0 0
        %501 = vmatprep.subr.bf16.mxu0 0
        %502 = vmatpush1.bf16.msra.mxu0 0
        %503 = vmatprep.subr.bf16.mxu0 0
        %504 = vmatpush1.bf16.msra.mxu0 0
        %505 = vmatprep.subr.bf16.mxu0 0
        %506 = vmatpush1.bf16.msra.mxu0 0
        %507 = vmatprep.subr.bf16.mxu0 0
        %508 = vmatpush1.bf16.msra.mxu0 0
        %509 = vmatprep.subr.bf16.mxu0 0
        %510 = vmatpush1.bf16.msra.mxu0 0
        %511 = vmatprep.mubr.bf16.mxu0 0
        %512 = vmatmul.mubr.bf16.gmra.mrb[0].mxu0 %v415
        %v513 = vpop.f32.mrb[0].mxu0
        %v514 = vadd.f32 %v381, %v513
        %v515 = vpop.f32.mrb[0].mxu0
        %v516 = vpop.f32.mrb[0].mxu0
        %v517 = vadd.f32 %v381, %v516
        %v518 = vpop.f32.mrb[0].mxu0
        %519 = vmatprep.mubr.bf16.mxu0 0
        %520 = vmatmul.mubr.bf16.gmra.mrb[0].mxu0 %v416
        %v521 = vpop.f32.mrb[0].mxu0
        %v522 = vadd.f32 %v381, %v521
        %v523 = vpop.f32.mrb[0].mxu0
        %v524 = vpop.f32.mrb[0].mxu0
        %v525 = vadd.f32 %v381, %v524
        %v526 = vpop.f32.mrb[0].mxu0
        %527 = vmatprep.mubr.bf16.mxu0 0
        %528 = vmatmul.mubr.bf16.gmra.mrb[0].mxu0 %v417
        %v529 = vpop.f32.mrb[0].mxu0
        %v530 = vadd.f32 %v381, %v529
        %v531 = vpop.f32.mrb[0].mxu0
        %v532 = vpop.f32.mrb[0].mxu0
        %v533 = vadd.f32 %v381, %v532
        %v534 = vpop.f32.mrb[0].mxu0
        %535 = vmatprep.mubr.bf16.mxu0 0
        %536 = vmatmul.mubr.bf16.gmra.mrb[0].mxu0 %v418
        %v537 = vpop.f32.mrb[0].mxu0
        %v538 = vadd.f32 %v381, %v537
        %v539 = vpop.f32.mrb[0].mxu0
        %v540 = vpop.f32.mrb[0].mxu0
        %v541 = vadd.f32 %v381, %v540
        %v542 = vpop.f32.mrb[0].mxu0
        %543 = vmatprep.mubr.bf16.mxu0 0
        %544 = vmatmul.mubr.bf16.gmra.mrb[0].mxu0 %v419
        %v545 = vpop.f32.mrb[0].mxu0
        %v546 = vadd.f32 %v381, %v545
        %v547 = vpop.f32.mrb[0].mxu0
        %v548 = vpop.f32.mrb[0].mxu0
        %v549 = vadd.f32 %v381, %v548
        %v550 = vpop.f32.mrb[0].mxu0
        %551 = vmatprep.mubr.bf16.mxu0 0
        %552 = vmatmul.mubr.bf16.gmra.mrb[0].mxu0 %v420
        %v553 = vpop.f32.mrb[0].mxu0
        %v554 = vadd.f32 %v381, %v553
        %v555 = vpop.f32.mrb[0].mxu0
        %v556 = vpop.f32.mrb[0].mxu0
        %v557 = vadd.f32 %v381, %v556
        %v558 = vpop.f32.mrb[0].mxu0
        %559 = vmatprep.mubr.bf16.mxu0 0
        %560 = vmatmul.mubr.bf16.gmra.mrb[0].mxu0 %v421
        %v561 = vpop.f32.mrb[0].mxu0
        %v562 = vadd.f32 %v381, %v561
        %v563 = vpop.f32.mrb[0].mxu0
        %v564 = vpop.f32.mrb[0].mxu0
        %v565 = vadd.f32 %v381, %v564
        %v566 = vpop.f32.mrb[0].mxu0
        %567 = vmatprep.mubr.bf16.mxu0 0
        %568 = vmatmul.mubr.bf16.gmra.mrb[0].mxu0 %v422
        %v569 = vpop.f32.mrb[0].mxu0
        %v570 = vadd.f32 %v381, %v569
        %v571 = vpop.f32.mrb[0].mxu0
        %v572 = vpop.f32.mrb[0].mxu0
        %v573 = vadd.f32 %v381, %v572
        %v574 = vpop.f32.mrb[0].mxu0
        %575 = vdwg.mxu0
        %v576 = vtanh.pop %v514
        %v577 = vtanh.pop %v517
        %v578 = vtanh.pop %v522
        %v579 = vtanh.pop %v525
        %v580 = vtanh.pop %v530
        %v581 = vtanh.pop %v533
        %v582 = vtanh.pop %v538
        %v583 = vtanh.pop %v541
        %v584 = vtanh.pop %v546
        %v585 = vtanh.pop %v549
        %v586 = vtanh.pop %v554
        %v587 = vtanh.pop %v557
        %v588 = vtanh.pop %v562
        %v589 = vtanh.pop %v565
        %v590 = vtanh.pop %v570
        %v591 = vtanh.pop %v573
        %v592 = vpack.c.bf16 %v577, %v576
        %v593 = vpack.c.bf16 %v579, %v578
        %v594 = vpack.c.bf16 %v581, %v580
        %v595 = vpack.c.bf16 %v583, %v582
        %v596 = vpack.c.bf16 %v585, %v584
        %v597 = vpack.c.bf16 %v587, %v586
        %v598 = vpack.c.bf16 %v589, %v588
        %v599 = vpack.c.bf16 %v591, %v590
        %600 = vst [vmem:[#allocation2] sm:$0xff] %v592
        %601 = vst [vmem:[#allocation2 + $0x8] sm:$0xff] %v593
        %602 = vst [vmem:[#allocation2 + $0x10] sm:$0xff] %v594
        %603 = vst [vmem:[#allocation2 + $0x18] sm:$0xff] %v595
        %604 = vst [vmem:[#allocation2 + $0x20] sm:$0xff] %v596
        %605 = vst [vmem:[#allocation2 + $0x28] sm:$0xff] %v597
        %606 = vst [vmem:[#allocation2 + $0x30] sm:$0xff] %v598
        %607 = vst [vmem:[#allocation2 + $0x38] sm:$0xff] %v599
        %v608 = vld [vmem:[#allocation2] sm:$0xff]
        %v609 = vld [vmem:[#allocation2 + $0x8] sm:$0xff]
        %v610 = vld [vmem:[#allocation2 + $0x10] sm:$0xff]
        %v611 = vld [vmem:[#allocation2 + $0x18] sm:$0xff]
        %v612 = vld [vmem:[#allocation2 + $0x20] sm:$0xff]
        %v613 = vld [vmem:[#allocation2 + $0x28] sm:$0xff]
        %v614 = vld [vmem:[#allocation2 + $0x30] sm:$0xff]
        %v615 = vld [vmem:[#allocation2 + $0x38] sm:$0xff]
        %v616 = vld [vmem:[#allocation8] sm:$0xf]
        %v617 = vld [vmem:[#allocation8 + $0x4] sm:$0xf]
        %v618 = vld [vmem:[#allocation8 + $0x8] sm:$0xf]
        %v619 = vld [vmem:[#allocation8 + $0xc] sm:$0xf]
        %v620 = vld [vmem:[#allocation8 + $0x10] sm:$0xf]
        %v621 = vld [vmem:[#allocation8 + $0x14] sm:$0xf]
        %v622 = vld [vmem:[#allocation8 + $0x18] sm:$0xf]
        %v623 = vld [vmem:[#allocation8 + $0x1c] sm:$0xf]
        %v624 = vld [vmem:[#allocation8 + $0x20] sm:$0xf]
        %v625 = vld [vmem:[#allocation8 + $0x24] sm:$0xf]
        %v626 = vld [vmem:[#allocation8 + $0x28] sm:$0xf]
        %v627 = vld [vmem:[#allocation8 + $0x2c] sm:$0xf]
        %v628 = vld [vmem:[#allocation8 + $0x30] sm:$0xf]
        %v629 = vld [vmem:[#allocation8 + $0x34] sm:$0xf]
        %v630 = vld [vmem:[#allocation8 + $0x38] sm:$0xf]
        %v631 = vld [vmem:[#allocation8 + $0x3c] sm:$0xf]
        %v632 = vld [vmem:[%s4] sm:$0x1]
        %v634 = vlaneseq
        %v635 = vshrl.u32 %v634, 7
        %v636 = vsub.s32 0, %v635
        %v637 = vrot.slane %v632, %v636
        %v655 = vunpack.c.l.b16 %v616
        %v656 = vunpack.c.l.b16 %v617
        %v657 = vunpack.c.l.b16 %v618
        %v658 = vunpack.c.l.b16 %v619
        %v659 = vunpack.c.l.b16 %v620
        %v660 = vunpack.c.l.b16 %v621
        %v661 = vunpack.c.l.b16 %v622
        %v662 = vunpack.c.l.b16 %v623
        %v663 = vunpack.c.l.b16 %v624
        %v664 = vunpack.c.l.b16 %v625
        %v665 = vunpack.c.l.b16 %v626
        %v666 = vunpack.c.l.b16 %v627
        %v667 = vunpack.c.l.b16 %v628
        %v668 = vunpack.c.l.b16 %v629
        %v669 = vunpack.c.l.b16 %v630
        %v670 = vunpack.c.l.b16 %v631
        %v671 = vpack.c.b16 %v656, %v655
        %v672 = vpack.c.b16 %v658, %v657
        %v673 = vpack.c.b16 %v660, %v659
        %v674 = vpack.c.b16 %v662, %v661
        %v675 = vpack.c.b16 %v664, %v663
        %v676 = vpack.c.b16 %v666, %v665
        %v677 = vpack.c.b16 %v668, %v667
        %v678 = vpack.c.b16 %v670, %v669
        %687 = vmatprep.subr.bf16.mxu0 0
        %688 = vmatpush1.bf16.msra.mxu0 %v671
        %689 = vmatprep.subr.bf16.mxu0 0
        %690 = vmatpush1.bf16.msra.mxu0 %v672
        %691 = vmatprep.subr.bf16.mxu0 0
        %692 = vmatpush1.bf16.msra.mxu0 %v673
        %693 = vmatprep.subr.bf16.mxu0 0
        %694 = vmatpush1.bf16.msra.mxu0 %v674
        %695 = vmatprep.subr.bf16.mxu0 0
        %696 = vmatpush1.bf16.msra.mxu0 %v675
        %697 = vmatprep.subr.bf16.mxu0 0
        %698 = vmatpush1.bf16.msra.mxu0 %v676
        %699 = vmatprep.subr.bf16.mxu0 0
        %700 = vmatpush1.bf16.msra.mxu0 %v677
        %701 = vmatprep.subr.bf16.mxu0 0
        %702 = vmatpush1.bf16.msra.mxu0 %v678
        %703 = vmatprep.subr.bf16.mxu0 0
        %704 = vmatpush1.bf16.msra.mxu0 0
        %705 = vmatprep.subr.bf16.mxu0 0
        %706 = vmatpush1.bf16.msra.mxu0 0
        %707 = vmatprep.subr.bf16.mxu0 0
        %708 = vmatpush1.bf16.msra.mxu0 0
        %709 = vmatprep.subr.bf16.mxu0 0
        %710 = vmatpush1.bf16.msra.mxu0 0
        %711 = vmatprep.subr.bf16.mxu0 0
        %712 = vmatpush1.bf16.msra.mxu0 0
        %713 = vmatprep.subr.bf16.mxu0 0
        %714 = vmatpush1.bf16.msra.mxu0 0
        %715 = vmatprep.subr.bf16.mxu0 0
        %716 = vmatpush1.bf16.msra.mxu0 0
        %717 = vmatprep.subr.bf16.mxu0 0
        %718 = vmatpush1.bf16.msra.mxu0 0
        %719 = vmatprep.mubr.bf16.mxu0 0
        %720 = vmatmul.mubr.bf16.gmra.mrb[0].mxu0 %v608
        %v721 = vpop.f32.mrb[0].mxu0
        %v722 = vadd.f32 %v637, %v721
        %v723 = vpop.f32.mrb[0].mxu0
        %v724 = vpop.f32.mrb[0].mxu0
        %v725 = vadd.f32 %v637, %v724
        %v726 = vpop.f32.mrb[0].mxu0
        %727 = vmatprep.mubr.bf16.mxu0 0
        %728 = vmatmul.mubr.bf16.gmra.mrb[0].mxu0 %v609
        %v729 = vpop.f32.mrb[0].mxu0
        %v730 = vadd.f32 %v637, %v729
        %v731 = vpop.f32.mrb[0].mxu0
        %v732 = vpop.f32.mrb[0].mxu0
        %v733 = vadd.f32 %v637, %v732
        %v734 = vpop.f32.mrb[0].mxu0
        %735 = vmatprep.mubr.bf16.mxu0 0
        %736 = vmatmul.mubr.bf16.gmra.mrb[0].mxu0 %v610
        %v737 = vpop.f32.mrb[0].mxu0
        %v738 = vadd.f32 %v637, %v737
        %v739 = vpop.f32.mrb[0].mxu0
        %v740 = vpop.f32.mrb[0].mxu0
        %v741 = vadd.f32 %v637, %v740
        %v742 = vpop.f32.mrb[0].mxu0
        %743 = vmatprep.mubr.bf16.mxu0 0
        %744 = vmatmul.mubr.bf16.gmra.mrb[0].mxu0 %v611
        %v745 = vpop.f32.mrb[0].mxu0
        %v746 = vadd.f32 %v637, %v745
        %v747 = vpop.f32.mrb[0].mxu0
        %v748 = vpop.f32.mrb[0].mxu0
        %v749 = vadd.f32 %v637, %v748
        %v750 = vpop.f32.mrb[0].mxu0
        %751 = vmatprep.mubr.bf16.mxu0 0
        %752 = vmatmul.mubr.bf16.gmra.mrb[0].mxu0 %v612
        %v753 = vpop.f32.mrb[0].mxu0
        %v754 = vadd.f32 %v637, %v753
        %v755 = vpop.f32.mrb[0].mxu0
        %v756 = vpop.f32.mrb[0].mxu0
        %v757 = vadd.f32 %v637, %v756
        %v758 = vpop.f32.mrb[0].mxu0
        %759 = vmatprep.mubr.bf16.mxu0 0
        %760 = vmatmul.mubr.bf16.gmra.mrb[0].mxu0 %v613
        %v761 = vpop.f32.mrb[0].mxu0
        %v762 = vadd.f32 %v637, %v761
        %v763 = vpop.f32.mrb[0].mxu0
        %v764 = vpop.f32.mrb[0].mxu0
        %v765 = vadd.f32 %v637, %v764
        %v766 = vpop.f32.mrb[0].mxu0
        %767 = vmatprep.mubr.bf16.mxu0 0
        %768 = vmatmul.mubr.bf16.gmra.mrb[0].mxu0 %v614
        %v769 = vpop.f32.mrb[0].mxu0
        %v770 = vadd.f32 %v637, %v769
        %v771 = vpop.f32.mrb[0].mxu0
        %v772 = vpop.f32.mrb[0].mxu0
        %v773 = vadd.f32 %v637, %v772
        %v774 = vpop.f32.mrb[0].mxu0
        %775 = vmatprep.mubr.bf16.mxu0 0
        %776 = vmatmul.mubr.bf16.gmra.mrb[0].mxu0 %v615
        %v777 = vpop.f32.mrb[0].mxu0
        %v778 = vadd.f32 %v637, %v777
        %v779 = vpop.f32.mrb[0].mxu0
        %v780 = vpop.f32.mrb[0].mxu0
        %v781 = vadd.f32 %v637, %v780
        %v782 = vpop.f32.mrb[0].mxu0
        %783 = vdwg.mxu0
        %v784 = vtanh.pop %v722
        %v785 = vtanh.pop %v725
        %v786 = vtanh.pop %v730
        %v787 = vtanh.pop %v733
        %v788 = vtanh.pop %v738
        %v789 = vtanh.pop %v741
        %v790 = vtanh.pop %v746
        %v791 = vtanh.pop %v749
        %v792 = vtanh.pop %v754
        %v793 = vtanh.pop %v757
        %v794 = vtanh.pop %v762
        %v795 = vtanh.pop %v765
        %v796 = vtanh.pop %v770
        %v797 = vtanh.pop %v773
        %v798 = vtanh.pop %v778
        %v799 = vtanh.pop %v781
        %v800 = vpack.c.bf16 %v785, %v784
        %v801 = vpack.c.bf16 %v787, %v786
        %v802 = vpack.c.bf16 %v789, %v788
        %v803 = vpack.c.bf16 %v791, %v790
        %v804 = vpack.c.bf16 %v793, %v792
        %v805 = vpack.c.bf16 %v795, %v794
        %v806 = vpack.c.bf16 %v797, %v796
        %v807 = vpack.c.bf16 %v799, %v798
        %808 = vst [vmem:[#allocation2] sm:$0xff] %v800
        %809 = vst [vmem:[#allocation2 + $0x8] sm:$0xff] %v801
        %810 = vst [vmem:[#allocation2 + $0x10] sm:$0xff] %v802
        %811 = vst [vmem:[#allocation2 + $0x18] sm:$0xff] %v803
        %812 = vst [vmem:[#allocation2 + $0x20] sm:$0xff] %v804
        %813 = vst [vmem:[#allocation2 + $0x28] sm:$0xff] %v805
        %814 = vst [vmem:[#allocation2 + $0x30] sm:$0xff] %v806
        %815 = vst [vmem:[#allocation2 + $0x38] sm:$0xff] %v807
        %v816 = vld [vmem:[#allocation2] sm:$0xff]
        %v817 = vld [vmem:[#allocation2 + $0x8] sm:$0xff]
        %v818 = vld [vmem:[#allocation2 + $0x10] sm:$0xff]
        %v819 = vld [vmem:[#allocation2 + $0x18] sm:$0xff]
        %v820 = vld [vmem:[#allocation2 + $0x20] sm:$0xff]
        %v821 = vld [vmem:[#allocation2 + $0x28] sm:$0xff]
        %v822 = vld [vmem:[#allocation2 + $0x30] sm:$0xff]
        %v823 = vld [vmem:[#allocation2 + $0x38] sm:$0xff]
        %v824 = vld [vmem:[#allocation9] sm:$0xf]
        %v825 = vld [vmem:[#allocation9 + $0x4] sm:$0xf]
        %v826 = vld [vmem:[#allocation9 + $0x8] sm:$0xf]
        %v827 = vld [vmem:[#allocation9 + $0xc] sm:$0xf]
        %v828 = vld [vmem:[#allocation9 + $0x10] sm:$0xf]
        %v829 = vld [vmem:[#allocation9 + $0x14] sm:$0xf]
        %v830 = vld [vmem:[#allocation9 + $0x18] sm:$0xf]
        %v831 = vld [vmem:[#allocation9 + $0x1c] sm:$0xf]
        %v832 = vld [vmem:[#allocation9 + $0x20] sm:$0xf]
        %v833 = vld [vmem:[#allocation9 + $0x24] sm:$0xf]
        %v834 = vld [vmem:[#allocation9 + $0x28] sm:$0xf]
        %v835 = vld [vmem:[#allocation9 + $0x2c] sm:$0xf]
        %v836 = vld [vmem:[#allocation9 + $0x30] sm:$0xf]
        %v837 = vld [vmem:[#allocation9 + $0x34] sm:$0xf]
        %v838 = vld [vmem:[#allocation9 + $0x38] sm:$0xf]
        %v839 = vld [vmem:[#allocation9 + $0x3c] sm:$0xf]
        %v840 = vld [vmem:[%s6] sm:$0x1]
        %v842 = vlaneseq
        %v843 = vshrl.u32 %v842, 7
        %v844 = vsub.s32 0, %v843
        %v845 = vrot.slane %v840, %v844
        %v863 = vunpack.c.l.b16 %v824
        %v864 = vunpack.c.l.b16 %v825
        %v865 = vunpack.c.l.b16 %v826
        %v866 = vunpack.c.l.b16 %v827
        %v867 = vunpack.c.l.b16 %v828
        %v868 = vunpack.c.l.b16 %v829
        %v869 = vunpack.c.l.b16 %v830
        %v870 = vunpack.c.l.b16 %v831
        %v871 = vunpack.c.l.b16 %v832
        %v872 = vunpack.c.l.b16 %v833
        %v873 = vunpack.c.l.b16 %v834
        %v874 = vunpack.c.l.b16 %v835
        %v875 = vunpack.c.l.b16 %v836
        %v876 = vunpack.c.l.b16 %v837
        %v877 = vunpack.c.l.b16 %v838
        %v878 = vunpack.c.l.b16 %v839
        %v879 = vpack.c.b16 %v864, %v863
        %v880 = vpack.c.b16 %v866, %v865
        %v881 = vpack.c.b16 %v868, %v867
        %v882 = vpack.c.b16 %v870, %v869
        %v883 = vpack.c.b16 %v872, %v871
        %v884 = vpack.c.b16 %v874, %v873
        %v885 = vpack.c.b16 %v876, %v875
        %v886 = vpack.c.b16 %v878, %v877
        %895 = vmatprep.subr.bf16.mxu0 0
        %896 = vmatpush1.bf16.msra.mxu0 %v879
        %897 = vmatprep.subr.bf16.mxu0 0
        %898 = vmatpush1.bf16.msra.mxu0 %v880
        %899 = vmatprep.subr.bf16.mxu0 0
        %900 = vmatpush1.bf16.msra.mxu0 %v881
        %901 = vmatprep.subr.bf16.mxu0 0
        %902 = vmatpush1.bf16.msra.mxu0 %v882
        %903 = vmatprep.subr.bf16.mxu0 0
        %904 = vmatpush1.bf16.msra.mxu0 %v883
        %905 = vmatprep.subr.bf16.mxu0 0
        %906 = vmatpush1.bf16.msra.mxu0 %v884
        %907 = vmatprep.subr.bf16.mxu0 0
        %908 = vmatpush1.bf16.msra.mxu0 %v885
        %909 = vmatprep.subr.bf16.mxu0 0
        %910 = vmatpush1.bf16.msra.mxu0 %v886
        %911 = vmatprep.subr.bf16.mxu0 0
        %912 = vmatpush1.bf16.msra.mxu0 0
        %913 = vmatprep.subr.bf16.mxu0 0
        %914 = vmatpush1.bf16.msra.mxu0 0
        %915 = vmatprep.subr.bf16.mxu0 0
        %916 = vmatpush1.bf16.msra.mxu0 0
        %917 = vmatprep.subr.bf16.mxu0 0
        %918 = vmatpush1.bf16.msra.mxu0 0
        %919 = vmatprep.subr.bf16.mxu0 0
        %920 = vmatpush1.bf16.msra.mxu0 0
        %921 = vmatprep.subr.bf16.mxu0 0
        %922 = vmatpush1.bf16.msra.mxu0 0
        %923 = vmatprep.subr.bf16.mxu0 0
        %924 = vmatpush1.bf16.msra.mxu0 0
        %925 = vmatprep.subr.bf16.mxu0 0
        %926 = vmatpush1.bf16.msra.mxu0 0
        %927 = vmatprep.mubr.bf16.mxu0 0
        %928 = vmatmul.mubr.bf16.gmra.mrb[0].mxu0 %v816
        %v929 = vpop.f32.mrb[0].mxu0
        %v930 = vadd.f32 %v845, %v929
        %v931 = vpop.f32.mrb[0].mxu0
        %v932 = vpop.f32.mrb[0].mxu0
        %v933 = vadd.f32 %v845, %v932
        %v934 = vpop.f32.mrb[0].mxu0
        %935 = vmatprep.mubr.bf16.mxu0 0
        %936 = vmatmul.mubr.bf16.gmra.mrb[0].mxu0 %v817
        %v937 = vpop.f32.mrb[0].mxu0
        %v938 = vadd.f32 %v845, %v937
        %v939 = vpop.f32.mrb[0].mxu0
        %v940 = vpop.f32.mrb[0].mxu0
        %v941 = vadd.f32 %v845, %v940
        %v942 = vpop.f32.mrb[0].mxu0
        %943 = vmatprep.mubr.bf16.mxu0 0
        %944 = vmatmul.mubr.bf16.gmra.mrb[0].mxu0 %v818
        %v945 = vpop.f32.mrb[0].mxu0
        %v946 = vadd.f32 %v845, %v945
        %v947 = vpop.f32.mrb[0].mxu0
        %v948 = vpop.f32.mrb[0].mxu0
        %v949 = vadd.f32 %v845, %v948
        %v950 = vpop.f32.mrb[0].mxu0
        %951 = vmatprep.mubr.bf16.mxu0 0
        %952 = vmatmul.mubr.bf16.gmra.mrb[0].mxu0 %v819
        %v953 = vpop.f32.mrb[0].mxu0
        %v954 = vadd.f32 %v845, %v953
        %v955 = vpop.f32.mrb[0].mxu0
        %v956 = vpop.f32.mrb[0].mxu0
        %v957 = vadd.f32 %v845, %v956
        %v958 = vpop.f32.mrb[0].mxu0
        %959 = vmatprep.mubr.bf16.mxu0 0
        %960 = vmatmul.mubr.bf16.gmra.mrb[0].mxu0 %v820
        %v961 = vpop.f32.mrb[0].mxu0
        %v962 = vadd.f32 %v845, %v961
        %v963 = vpop.f32.mrb[0].mxu0
        %v964 = vpop.f32.mrb[0].mxu0
        %v965 = vadd.f32 %v845, %v964
        %v966 = vpop.f32.mrb[0].mxu0
        %967 = vmatprep.mubr.bf16.mxu0 0
        %968 = vmatmul.mubr.bf16.gmra.mrb[0].mxu0 %v821
        %v969 = vpop.f32.mrb[0].mxu0
        %v970 = vadd.f32 %v845, %v969
        %v971 = vpop.f32.mrb[0].mxu0
        %v972 = vpop.f32.mrb[0].mxu0
        %v973 = vadd.f32 %v845, %v972
        %v974 = vpop.f32.mrb[0].mxu0
        %975 = vmatprep.mubr.bf16.mxu0 0
        %976 = vmatmul.mubr.bf16.gmra.mrb[0].mxu0 %v822
        %v977 = vpop.f32.mrb[0].mxu0
        %v978 = vadd.f32 %v845, %v977
        %v979 = vpop.f32.mrb[0].mxu0
        %v980 = vpop.f32.mrb[0].mxu0
        %v981 = vadd.f32 %v845, %v980
        %v982 = vpop.f32.mrb[0].mxu0
        %983 = vmatprep.mubr.bf16.mxu0 0
        %984 = vmatmul.mubr.bf16.gmra.mrb[0].mxu0 %v823
        %v985 = vpop.f32.mrb[0].mxu0
        %v986 = vadd.f32 %v845, %v985
        %v987 = vpop.f32.mrb[0].mxu0
        %v988 = vpop.f32.mrb[0].mxu0
        %v989 = vadd.f32 %v845, %v988
        %v990 = vpop.f32.mrb[0].mxu0
        %991 = vdwg.mxu0
        %992 = vst [vmem:[%s340] sm:$0xff] %v930
        %993 = vst [vmem:[%s340 + $0x8] sm:$0xff] %v933
        %994 = vst [vmem:[%s340 + $0x10] sm:$0xff] %v938
        %995 = vst [vmem:[%s340 + $0x18] sm:$0xff] %v941
        %996 = vst [vmem:[%s340 + $0x20] sm:$0xff] %v946
        %997 = vst [vmem:[%s340 + $0x28] sm:$0xff] %v949
        %998 = vst [vmem:[%s340 + $0x30] sm:$0xff] %v954
        %999 = vst [vmem:[%s340 + $0x38] sm:$0xff] %v957
        %1000 = vst [vmem:[%s340 + $0x40] sm:$0xff] %v962
        %1001 = vst [vmem:[%s340 + $0x48] sm:$0xff] %v965
        %1002 = vst [vmem:[%s340 + $0x50] sm:$0xff] %v970
        %1003 = vst [vmem:[%s340 + $0x58] sm:$0xff] %v973
        %1004 = vst [vmem:[%s340 + $0x60] sm:$0xff] %v978
        %1005 = vst [vmem:[%s340 + $0x68] sm:$0xff] %v981
        %1006 = vst [vmem:[%s340 + $0x70] sm:$0xff] %v986
        %1007 = vst [vmem:[%s340 + $0x78] sm:$0xff] %v989
        %s1008 = sand.u32 %s186, 1
        %s1009 = scalar_lea.sflag [#allocation5], %s1008
        %s1010 = sand.u32 %s186, 1
        %s1011 = smul.addr %s1010, 128
        %s1012 = scalar_lea.vmem [#allocation11], %s1011
        // Predicated region
        $region65: #{tpu_custom_call.1} parent=47 // pred_check
          %p1013 = pneg %p196
        $region66: #{tpu_custom_call.1} parent=47 // pred_check_branch
          %1015 = sbr.rel (%p1013) target = $region68
        $region67: #{tpu_custom_call.1} parent=47 // pred_region
          %s1016 = smul.u32 16, %s26
          %s1018 = ssub.s32 2048, 2048
          %1019 = vsyncadd %s1009, %s1018
          %s1020 = smul.addr %s1016, 128
          %s1021 = scalar_lea.hbm %s7, %s1020
          %s1022 = sshll.u32 %s1012, 4
          %s1023 = int_to_ptr.vmem [resolvable:$true] %s1022
          %1028 = dma.vmem_to_hbm [thread:$0]  %s1023, 2048, %s1021, %s1009, 128, 128, 8
        $region68: #{tpu_custom_call.1} parent=47 // pred_fallthru
          _
      $region48: #{tpu_custom_call.1} parent=5 // pred_fallthru
        _
      %p1029 = scmp.le.s32.totalorder 2, %s21
      // Predicated region
      $region69: #{tpu_custom_call.1} parent=5 // pred_check
        %p1030 = pneg %p1029
      $region70: #{tpu_custom_call.1} parent=5 // pred_check_branch
        %1032 = sbr.rel (%p1030) target = $region72
      $region71: #{tpu_custom_call.1} parent=5 // pred_region
        %s1033 = ssub.s32 %s21, 2
        // Predicated region
        $region73: #{tpu_custom_call.1} parent=71 // pred_check
          %p1034 = pneg %p202
        $region74: #{tpu_custom_call.1} parent=71 // pred_check_branch
          %1036 = sbr.rel (%p1034) target = $region76
        $region75: #{tpu_custom_call.1} parent=71 // pred_region
          %s1037 = sand.u32 %s187, 1
          %s1038 = scalar_lea.sflag [#allocation5], %s1037
          %s1039 = sand.u32 %s187, 1
          %s1040 = smul.addr %s1039, 128
          %s1041 = scalar_lea.vmem [#allocation11], %s1040
          %1042 = dma.done %s1038, 2048
        $region76: #{tpu_custom_call.1} parent=71 // pred_fallthru
          _
      $region72: #{tpu_custom_call.1} parent=5 // pred_fallthru
        _
    $region6: #{tpu_custom_call.1} parent=1 // loop_footer
      %s25 = sadd.s32 1, %s21
    $region7: #{tpu_custom_call.1} parent=1 // loop_footer_branch
      %20 = sbr.rel target = $region3
    $region8: #{tpu_custom_call.1} parent=1 // loop_exit
      _
    %1043 = vsyncpa [#allocation4], 1
    %s1044 = scalar_lea.sflag [#allocation4], 1
    %1045 = vsyncpa %s1044, 1
    %1046 = vsyncpa [#allocation7], 1
    %1047 = vsyncpa [#allocation10], 1
    %1048 = vsyncpa [#allocation5], 1
    %s1049 = scalar_lea.sflag [#allocation5], 1
    %1050 = vsyncpa %s1049, 1

</llo_original>
